<compile_context>
chip_gen: v6e
topology: v6e:2x2x1
jax: 0.10.0
libtpu: 0.0.40
codegen_flags: <defaults>
</compile_context>

<pallas_src>
import math
import functools

import jax
import jax.numpy as jnp
from jax.experimental import pallas as pl
from jax.experimental.pallas import tpu as pltpu


def _round_up(x, m):
    return ((x + m - 1) // m) * m


def _equal_linear_kernel_single_k(x_ref, w_ref, b_ref, o_ref, *, scale):
    """Single K step: whole contraction in one dot, no accumulator scratch.

    x_ref: (tm, Kp)   w_ref: (Kp, tn)   b_ref: (1, tn)   o_ref: (tm, tn)
    """
    acc = jnp.dot(x_ref[...], w_ref[...], preferred_element_type=jnp.float32)
    o_ref[...] = (acc * scale + b_ref[...].astype(jnp.float32)).astype(o_ref.dtype)


def _equal_linear_kernel_multi_k(x_ref, w_ref, b_ref, o_ref, acc_ref, *, scale):
    """Multi K step: f32 accumulator persists across the K grid axis.

    x_ref: (tm, tk)   w_ref: (tk, tn)   b_ref: (1, tn)
    o_ref: (tm, tn)   acc_ref: (tm, tn) f32 scratch
    """
    k = pl.program_id(2)
    partial = jnp.dot(x_ref[...], w_ref[...], preferred_element_type=jnp.float32)

    @pl.when(k == 0)
    def _():
        acc_ref[...] = partial          # no separate zero-init store

    @pl.when(k > 0)
    def _():
        acc_ref[...] += partial

    @pl.when(k == pl.num_programs(2) - 1)
    def _():
        # Equalized-LR scale + bias fused once per output tile, in f32.
        o_ref[...] = (acc_ref[...] * scale
                      + b_ref[...].astype(jnp.float32)).astype(o_ref.dtype)


def equal_linear(x, weight_orig, bias, *, tm=512, tn=512, tk=None):
    """x: (B, in_dim); weight_orig: (out_dim, in_dim); bias: (out_dim,)."""
    B, in_dim = x.shape
    out_dim, in_dim_w = weight_orig.shape
    assert in_dim == in_dim_w
    fan_in = in_dim                                   # weight[0][0].numel() == 1
    scale = math.sqrt(2.0 / fan_in)

    in_itemsize = jnp.dtype(x.dtype).itemsize
    out_itemsize = in_itemsize
    sublane = {4: 8, 2: 16, 1: 32}.get(in_itemsize, 8)

    # ---- VMEM budget (generation-aware) -----------------------------------
    try:
        vmem_cap = int(pltpu.get_tpu_info().vmem_capacity_bytes)
    except Exception:
        vmem_cap = 64 * 1024 * 1024                   # conservative (v7x-sized)
    vmem_limit = min(vmem_cap - 16 * 1024 * 1024, 100 * 1024 * 1024)
    vmem_limit = max(vmem_limit, 32 * 1024 * 1024)
    tile_budget = (vmem_limit * 3) // 4

    # ---- Tile sizing --------------------------------------------------------
    tm = min(tm, _round_up(B, sublane))               # dtype-aware sublane round
    tn = min(tn, _round_up(out_dim, 128))             # lane-dense output
    if tk is None:
        tk = _round_up(in_dim, 128)                   # cover all of K when it fits
    tk = min(tk, _round_up(in_dim, 128))

    def tile_bytes(tm_, tn_, tk_):
        # double-buffered x / w / bias / out tiles + (worst-case) f32 accumulator
        return (2 * (tm_ * tk_ + tk_ * tn_ + 8 * tn_) * in_itemsize
                + 2 * tm_ * tn_ * out_itemsize
                + tm_ * tn_ * 4)

    while tile_bytes(tm, tn, tk) > tile_budget and tk > 512:
        tk = _round_up(tk // 2, 128)
    while tile_bytes(tm, tn, tk) > tile_budget and tn > 128:
        tn = _round_up(tn // 2, 128)
    while tile_bytes(tm, tn, tk) > tile_budget and tm > sublane:
        tm = _round_up(tm // 2, sublane)

    # v7x megacore: guarantee >= 2 parallel (M, N) grid steps when possible
    # so both TensorCores get work.
    if (_round_up(B, tm) // tm) * (_round_up(out_dim, tn) // tn) == 1:
        if tn >= 256:
            tn = _round_up(tn // 2, 128)
        elif tm >= 2 * sublane:
            tm = _round_up(tm // 2, sublane)

    Bp = _round_up(B, tm)
    Np = _round_up(out_dim, tn)
    Kp = _round_up(in_dim, tk)

    # ---- Operand prep (pad only when needed; padded K contributes 0) -------
    x_p = x
    if (Bp, Kp) != (B, in_dim):
        x_p = jnp.pad(x, ((0, Bp - B), (0, Kp - in_dim)))

    # Canonical (in_dim, out_dim) layout for the (tm,tk)x(tk,tn) contraction.
    # In production this transpose/pad would be done once at parameter init.
    w_t = weight_orig.T
    if (Kp, Np) != (in_dim, out_dim):
        w_t = jnp.pad(w_t, ((0, Kp - in_dim), (0, Np - out_dim)))

    b_p = bias
    if Np != out_dim:
        b_p = jnp.pad(bias, (0, Np - out_dim))
    b_p = b_p.reshape(1, Np)

    grid_m, grid_n, grid_k = Bp // tm, Np // tn, Kp // tk

    if grid_k == 1:
        # Fast path: whole K in one step, no accumulator scratch.
        kernel = functools.partial(_equal_linear_kernel_single_k, scale=scale)
        grid = (grid_m, grid_n)
        in_specs = [
            pl.BlockSpec((tm, tk), lambda i, j: (i, 0)),    # x
            pl.BlockSpec((tk, tn), lambda i, j: (0, j)),    # weight (K, N)
            pl.BlockSpec((1, tn), lambda i, j: (0, j)),     # bias
        ]
        out_specs = pl.BlockSpec((tm, tn), lambda i, j: (i, j))
        scratch_shapes = []
        dim_sem = ("parallel", "parallel")
    else:
        kernel = functools.partial(_equal_linear_kernel_multi_k, scale=scale)
        grid = (grid_m, grid_n, grid_k)
        in_specs = [
            pl.BlockSpec((tm, tk), lambda i, j, k: (i, k)),  # x
            pl.BlockSpec((tk, tn), lambda i, j, k: (k, j)),  # weight (K, N)
            pl.BlockSpec((1, tn), lambda i, j, k: (0, j)),   # bias
        ]
        out_specs = pl.BlockSpec((tm, tn), lambda i, j, k: (i, j))
        scratch_shapes = [pltpu.VMEM((tm, tn), jnp.float32)]
        dim_sem = ("parallel", "parallel", "arbitrary")

    out_p = pl.pallas_call(
        kernel,
        out_shape=jax.ShapeDtypeStruct((Bp, Np), x.dtype),
        grid_spec=pltpu.PrefetchScalarGridSpec(
            num_scalar_prefetch=0,
            grid=grid,
            in_specs=in_specs,
            out_specs=out_specs,
            scratch_shapes=scratch_shapes,
        ),
        compiler_params=pltpu.CompilerParams(
            dimension_semantics=dim_sem,
            vmem_limit_bytes=vmem_limit,
        ),
    )(x_p, w_t, b_p)

    if (Bp, Np) != (B, out_dim):
        out_p = out_p[:B, :out_dim]
    return out_p


if __name__ == "__main__":
    key = jax.random.PRNGKey(0)
    kx, kw = jax.random.split(key)

    B, in_dim, out_dim = 8, 32, 16

    x = jax.random.normal(kx, (B, in_dim), dtype=jnp.float32)
    # Deterministic parameter init mirroring the module's __init__:
    weight_orig = jax.random.normal(kw, (out_dim, in_dim), dtype=jnp.float32)  # .normal_()
    bias = jnp.zeros((out_dim,), dtype=jnp.float32)                            # .zero_()

    out = equal_linear(x, weight_orig, bias)
    out = jax.block_until_ready(out)

    # Pure-JAX reference check of the equalized-LR linear semantics.
    scale = math.sqrt(2.0 / in_dim)
    ref = x @ (weight_orig * scale).T + bias
    assert out.shape == ref.shape
    assert jnp.allclose(out, ref, atol=1e-5, rtol=1e-5), "mismatch vs reference"

    print("KERNEL_OK")
</pallas_src>

<mosaic_0001>
module attributes {stable_mosaic.version = 11 : i64} {
  func.func @_equal_linear_kernel_single_k(%arg0: i32, %arg1: i32, %arg2: memref<8x128xf32, #tpu.memory_space<vmem>>, %arg3: memref<128x128xf32, #tpu.memory_space<vmem>>, %arg4: memref<1x128xf32, #tpu.memory_space<vmem>>, %arg5: memref<8x128xf32, #tpu.memory_space<vmem>>) attributes {dimension_semantics = [#tpu.dimension_semantics<parallel>, #tpu.dimension_semantics<parallel>], iteration_bounds = array<i64: 1, 1>, scalar_prefetch = 0 : i64, scratch_operands = 0 : i64, tpu.core_type = #tpu.core_type<tc>, window_params = [{transform_indices = @transform_0, window_bounds = array<i64: 8, 128>}, {transform_indices = @transform_1, window_bounds = array<i64: 128, 128>}, {transform_indices = @transform_2, window_bounds = array<i64: 1, 128>}, {transform_indices = @transform_3, window_bounds = array<i64: 8, 128>}]} {
    %c0 = arith.constant 0 : index
    %c0_0 = arith.constant 0 : index
    %0 = vector.load %arg2[%c0, %c0_0] : memref<8x128xf32, #tpu.memory_space<vmem>>, vector<8x128xf32>
    %c0_1 = arith.constant 0 : index
    %c0_2 = arith.constant 0 : index
    %1 = vector.load %arg3[%c0_1, %c0_2] : memref<128x128xf32, #tpu.memory_space<vmem>>, vector<128x128xf32>
    %cst = arith.constant dense<0.000000e+00> : vector<8x128xf32>
    %2 = tpu.matmul %0, %1, %cst {dimension_numbers = #tpu.dot_dimension_numbers<[1], [0], [0], [1], [0, 0, 1, 1], [], []>} : vector<8x128xf32>, vector<128x128xf32>, vector<8x128xf32> -> vector<8x128xf32>
    %cst_3 = arith.constant 2.500000e-01 : f32
    %3 = vector.broadcast %cst_3 : f32 to vector<8x128xf32>
    %4 = arith.mulf %2, %3 : vector<8x128xf32>
    %c0_4 = arith.constant 0 : index
    %c0_5 = arith.constant 0 : index
    %5 = vector.load %arg4[%c0_4, %c0_5] : memref<1x128xf32, #tpu.memory_space<vmem>>, vector<1x128xf32>
    %6 = vector.broadcast %5 : vector<1x128xf32> to vector<8x128xf32>
    %7 = arith.addf %4, %6 : vector<8x128xf32>
    %c0_6 = arith.constant 0 : index
    %c0_7 = arith.constant 0 : index
    %8 = vector.load %arg5[%c0_6, %c0_7] : memref<8x128xf32, #tpu.memory_space<vmem>>, vector<8x128xf32>
    tpu.vector_store %arg5[%c0_6, %c0_7], %7 {strides = array<i32>} : memref<8x128xf32, #tpu.memory_space<vmem>>, vector<8x128xf32>,
    return
  }
  func.func @transform_0(%arg0: i32, %arg1: i32) -> (i32, i32) {
    %c0_i32 = arith.constant 0 : i32
    %c0_i32_0 = arith.constant 0 : i32
    return %arg0, %c0_i32 : i32, i32
  }
  func.func @transform_1(%arg0: i32, %arg1: i32) -> (i32, i32) {
    %c0_i32 = arith.constant 0 : i32
    %c0_i32_0 = arith.constant 0 : i32
    return %c0_i32, %arg1 : i32, i32
  }
  func.func @transform_2(%arg0: i32, %arg1: i32) -> (i32, i32) {
    %c0_i32 = arith.constant 0 : i32
    %c0_i32_0 = arith.constant 0 : i32
    return %c0_i32, %arg1 : i32, i32
  }
  func.func @transform_3(%arg0: i32, %arg1: i32) -> (i32, i32) {
    %c0_i32 = arith.constant 0 : i32
    return %arg0, %arg1 : i32, i32
  }
}

</mosaic_0001>

<llo_original>
// kernel: tpu_custom_call.1
$region0: #{tpu_custom_call.1}
  #allocation0 [shape = 'u32[]', space=smem, size = 0x4, offset = 0x4, fixed_abs, tag = 'smem constant byte address 0x4 - core index']
  #allocation1 [shape = 'u32[144,128]{1,0:T(1,128)}', space=vmem, size = 0x12000, scoped, tag = 'internal scratch']
  %s0 = inlined_call_operand.hbm [shape: f32[8,128], index: 0, kind: input, shape index: {}]
  %s1 = inlined_call_operand.hbm [shape: f32[128,128], index: 1, kind: input, shape index: {}]
  %s2 = inlined_call_operand.vmem [shape: f32[1,128], index: 2, kind: input, shape index: {}]
  %s3 = inlined_call_operand.hbm [shape: f32[8,128], index: 3, kind: output, shape index: {}]
  %s4 = sld [smem:[#allocation0]]
  $region30: #{tpu_custom_call.1} parent=0
    _
  %s6 = ssub.s32 1, %s4
  %s7 = scalar_select 0, %s6, %s4
  $region1: #{tpu_custom_call.1} parent=0
    #allocation2 [shape = 'u8[4096]{0}', space=vmem, size = 0x1000, scoped, tag = 'input window, operand 0, single buffered']
    #allocation3 [shape = 's32[1]{0}', space=sflag, size = 0x4, scoped, tag = 'scoped memory for tpu_custom_call.1']
    #allocation4 [shape = 's32[1]{0}', space=sflag, size = 0x4, scoped, tag = 'scoped memory for tpu_custom_call.1']
    #allocation5 [shape = 'u8[65536]{0}', space=vmem, size = 0x10000, scoped, tag = 'input window, operand 1, single buffered']
    #allocation6 [shape = 's32[1]{0}', space=sflag, size = 0x4, scoped, tag = 'scoped memory for tpu_custom_call.1']
    #allocation7 [shape = 'u8[4096]{0}', space=vmem, size = 0x1000, scoped, tag = 'output window, operand 0, single buffered']
    %8 = vsyncpa [#allocation3], 0
    %9 = vsyncpa [#allocation6], 0
    %10 = vsyncpa [#allocation4], 0
    // Predicated region
    $region2: #{tpu_custom_call.1} parent=1 // pred_check
      _
    $region3: #{tpu_custom_call.1} parent=1 // pred_check_branch
      %12 = sbr.rel (0) target = $region5
    $region4: #{tpu_custom_call.1} parent=1 // pred_region
      %s14 = ssub.s32 128, 128
      %15 = vsyncadd [#allocation3], %s14
      %s17 = sshll.u32 [#allocation2], 4
      %s18 = int_to_ptr.vmem [resolvable:$true] %s17
      %20 = dma.hbm_to_vmem [thread:$0]  %s0, 128, %s18, [#allocation3]
    $region5: #{tpu_custom_call.1} parent=1 // pred_fallthru
      _
    // Predicated region
    $region6: #{tpu_custom_call.1} parent=1 // pred_check
      _
    $region7: #{tpu_custom_call.1} parent=1 // pred_check_branch
      %22 = sbr.rel (0) target = $region9
    $region8: #{tpu_custom_call.1} parent=1 // pred_region
      %s24 = ssub.s32 2048, 2048
      %25 = vsyncadd [#allocation6], %s24
      %s26 = sshll.u32 [#allocation5], 4
      %s27 = int_to_ptr.vmem [resolvable:$true] %s26
      %32 = dma.hbm_to_vmem [thread:$0]  %s1, 2048, %s27, [#allocation6], 128, 128, 8
    $region9: #{tpu_custom_call.1} parent=1 // pred_fallthru
      _
    // Predicated region
    $region10: #{tpu_custom_call.1} parent=1 // pred_check
      _
    $region11: #{tpu_custom_call.1} parent=1 // pred_check_branch
      %34 = sbr.rel (0) target = $region13
    $region12: #{tpu_custom_call.1} parent=1 // pred_region
      _
    $region13: #{tpu_custom_call.1} parent=1 // pred_fallthru
      _
    // Predicated region
    $region14: #{tpu_custom_call.1} parent=1 // pred_check
      _
    $region15: #{tpu_custom_call.1} parent=1 // pred_check_branch
      %36 = sbr.rel (0) target = $region17
    $region16: #{tpu_custom_call.1} parent=1 // pred_region
      %37 = dma.done [#allocation3], 128
    $region17: #{tpu_custom_call.1} parent=1 // pred_fallthru
      _
    // Predicated region
    $region18: #{tpu_custom_call.1} parent=1 // pred_check
      _
    $region19: #{tpu_custom_call.1} parent=1 // pred_check_branch
      %39 = sbr.rel (0) target = $region21
    $region20: #{tpu_custom_call.1} parent=1 // pred_region
      %40 = dma.done [#allocation6], 2048
    $region21: #{tpu_custom_call.1} parent=1 // pred_fallthru
      _
    %v41 = vld [vmem:[#allocation2] sm:$0xff]
    %v42 = vld [vmem:[#allocation5] sm:$0xff]
    %v43 = vld [vmem:[#allocation5 + $0x8] sm:$0xff]
    %v44 = vld [vmem:[#allocation5 + $0x10] sm:$0xff]
    %v45 = vld [vmem:[#allocation5 + $0x18] sm:$0xff]
    %v46 = vld [vmem:[#allocation5 + $0x20] sm:$0xff]
    %v47 = vld [vmem:[#allocation5 + $0x28] sm:$0xff]
    %v48 = vld [vmem:[#allocation5 + $0x30] sm:$0xff]
    %v49 = vld [vmem:[#allocation5 + $0x38] sm:$0xff]
    %v50 = vld [vmem:[#allocation5 + $0x40] sm:$0xff]
    %v51 = vld [vmem:[#allocation5 + $0x48] sm:$0xff]
    %v52 = vld [vmem:[#allocation5 + $0x50] sm:$0xff]
    %v53 = vld [vmem:[#allocation5 + $0x58] sm:$0xff]
    %v54 = vld [vmem:[#allocation5 + $0x60] sm:$0xff]
    %v55 = vld [vmem:[#allocation5 + $0x68] sm:$0xff]
    %v56 = vld [vmem:[#allocation5 + $0x70] sm:$0xff]
    %v57 = vld [vmem:[#allocation5 + $0x78] sm:$0xff]
    %58 = vmatprep.subr.mxu0 0.0
    %59 = vmatpush1.msra.mxu0 %v57
    %60 = vmatprep.subr.mxu0 0.0
    %61 = vmatpush1.msra.mxu0 %v56
    %62 = vmatprep.subr.mxu0 0.0
    %63 = vmatpush1.msra.mxu0 %v55
    %64 = vmatprep.subr.mxu0 0.0
    %65 = vmatpush1.msra.mxu0 %v54
    %66 = vmatprep.subr.mxu0 0.0
    %67 = vmatpush1.msra.mxu0 %v53
    %68 = vmatprep.subr.mxu0 0.0
    %69 = vmatpush1.msra.mxu0 %v52
    %70 = vmatprep.subr.mxu0 0.0
    %71 = vmatpush1.msra.mxu0 %v51
    %72 = vmatprep.subr.mxu0 0.0
    %73 = vmatpush1.msra.mxu0 %v50
    %74 = vmatprep.subr.mxu0 0.0
    %75 = vmatpush1.msra.mxu0 %v49
    %76 = vmatprep.subr.mxu0 0.0
    %77 = vmatpush1.msra.mxu0 %v48
    %78 = vmatprep.subr.mxu0 0.0
    %79 = vmatpush1.msra.mxu0 %v47
    %80 = vmatprep.subr.mxu0 0.0
    %81 = vmatpush1.msra.mxu0 %v46
    %82 = vmatprep.subr.mxu0 0.0
    %83 = vmatpush1.msra.mxu0 %v45
    %84 = vmatprep.subr.mxu0 0.0
    %85 = vmatpush1.msra.mxu0 %v44
    %86 = vmatprep.subr.mxu0 0.0
    %87 = vmatpush1.msra.mxu0 %v43
    %88 = vmatprep.subr.mxu0 0.0
    %89 = vmatpush1.msra.mxu0 %v42
    %90 = vmatprep.subr.mxu0 0.0
    %91 = vmatpush2.msra.mxu0 0.0
    %92 = vmatprep.subr.mxu0 0.0
    %93 = vmatpush2.msra.mxu0 0.0
    %94 = vmatprep.subr.mxu0 0.0
    %95 = vmatpush2.msra.mxu0 0.0
    %96 = vmatprep.subr.mxu0 0.0
    %97 = vmatpush2.msra.mxu0 0.0
    %98 = vmatprep.subr.mxu0 0.0
    %99 = vmatpush2.msra.mxu0 0.0
    %100 = vmatprep.subr.mxu0 0.0
    %101 = vmatpush2.msra.mxu0 0.0
    %102 = vmatprep.subr.mxu0 0.0
    %103 = vmatpush2.msra.mxu0 0.0
    %104 = vmatprep.subr.mxu0 0.0
    %105 = vmatpush2.msra.mxu0 0.0
    %106 = vmatprep.subr.mxu0 0.0
    %107 = vmatpush2.msra.mxu0 0.0
    %108 = vmatprep.subr.mxu0 0.0
    %109 = vmatpush2.msra.mxu0 0.0
    %110 = vmatprep.subr.mxu0 0.0
    %111 = vmatpush2.msra.mxu0 0.0
    %112 = vmatprep.subr.mxu0 0.0
    %113 = vmatpush2.msra.mxu0 0.0
    %114 = vmatprep.subr.mxu0 0.0
    %115 = vmatpush2.msra.mxu0 0.0
    %116 = vmatprep.subr.mxu0 0.0
    %117 = vmatpush2.msra.mxu0 0.0
    %118 = vmatprep.subr.mxu0 0.0
    %119 = vmatpush2.msra.mxu0 0.0
    %120 = vmatprep.subr.mxu0 0.0
    %121 = vmatpush2.msra.mxu0 0.0
    %122 = vmatprep.mubr.f32.mxu0 0.0
    %123 = vmatmul.mubr.f32.gmra.mxu0 %v41
    %v124 = vpop.f32.mrf.mxu0
    %v125 = vadd.f32 0.0, %v124
    %v126 = vpop.f32.mrf.mxu0
    %127 = vdwg.mxu0
    %v128 = vmul.f32 %v125, 0.25
    %v129 = vld [vmem:[%s2] sm:$0x1]
    %v131 = vlaneseq
    %v132 = vshrl.u32 %v131, 7
    %v133 = vsub.s32 0, %v132
    %v134 = vrot.slane %v129, %v133
    %v136 = vadd.f32 %v128, %v134
    %137 = vst [vmem:[#allocation7] sm:$0xff] %v136
    // Predicated region
    $region22: #{tpu_custom_call.1} parent=1 // pred_check
      _
    $region23: #{tpu_custom_call.1} parent=1 // pred_check_branch
      %139 = sbr.rel (0) target = $region25
    $region24: #{tpu_custom_call.1} parent=1 // pred_region
      %s141 = ssub.s32 128, 128
      %142 = vsyncadd [#allocation4], %s141
      %s144 = sshll.u32 [#allocation7], 4
      %s145 = int_to_ptr.vmem [resolvable:$true] %s144
      %147 = dma.vmem_to_hbm [thread:$0]  %s145, 128, %s3, [#allocation4]
    $region25: #{tpu_custom_call.1} parent=1 // pred_fallthru
      _
    // Predicated region
    $region26: #{tpu_custom_call.1} parent=1 // pred_check
      _
    $region27: #{tpu_custom_call.1} parent=1 // pred_check_branch
      %149 = sbr.rel (0) target = $region29
    $region28: #{tpu_custom_call.1} parent=1 // pred_region
      %150 = dma.done [#allocation4], 128
    $region29: #{tpu_custom_call.1} parent=1 // pred_fallthru
      _
    %151 = vsyncpa [#allocation3], 1
    %152 = vsyncpa [#allocation6], 1
    %153 = vsyncpa [#allocation4], 1

</llo_original>
